<compile_context>
chip_gen: v7x
topology: tpu7x:2x2x1
jax: 0.10.0
libtpu: 0.0.40
codegen_flags: <defaults>
</compile_context>

<pallas_src>
import jax
import jax.numpy as jnp
from jax.experimental import pallas as pl
from jax.experimental.pallas import tpu as pltpu

EPS = 1e-5


def _cos_cls_kernel(x_ref, w_ref, o_ref):
    # x_ref: (C, T)  channels-first pixel tile (native dtype: f32 or bf16)
    # w_ref: (K, C)  pre-normalized, pre-scaled class weights (constant over grid)
    # o_ref: (K, T)  scores tile
    x = x_ref[...]
    # Per-pixel ||x||_2 over channels, accumulated in f32 (XLU sublane reduce).
    sumsq = jnp.sum(jnp.square(x.astype(jnp.float32)), axis=0, keepdims=True)  # (1, T)
    r = pl.reciprocal(jnp.sqrt(sumsq) + EPS, approx=False)                     # (1, T)
    # MXU matmul in the tile's native dtype with f32 accumulation; normalize the
    # OUTPUT (K, T) instead of the (C, T) input tile.
    s = jnp.dot(w_ref[...], x, preferred_element_type=jnp.float32)            # (K, T)
    o_ref[...] = (s * r).astype(o_ref.dtype)


def _round_up(v, m):
    return -(-v // m) * m


def _choose_tile_hw(hw, c, b, in_itemsize,
                    budget_bytes=4 * 1024 * 1024, target_steps=8):
    """Pick the lane (pixel) tile size.

    Always a multiple of 128 (or full-extent when HW <= 128); Pallas masks the
    partial last block.  Capped by (a) a per-tile VMEM budget that is safe on
    v7x's 64 MiB parts and (b) a minimum total grid-step count so both v7x
    TensorCores get work and the DMA pipeline stays warm.
    """
    if hw <= 128:
        return hw  # full-extent block along the lane dim is always legal
    # Largest 128-aligned tile within the VMEM budget.
    cap = max(128, (budget_bytes // max(1, c * in_itemsize)) // 128 * 128)
    tile = min(_round_up(hw, 128), cap)
    # Guarantee >= target_steps total grid steps (>= 2 per batch element).
    steps_per_b = max(2, -(-target_steps // max(1, b)))
    tile_for_steps = max(128, _round_up(-(-hw // steps_per_b), 128))
    return min(tile, tile_for_steps)


def pixel_classifier_forward(x_nchw, weight_kc11, *, scale_factor):
    """Eval-mode forward of `pixel_classifier` (weight_norm=False path).

    x_nchw:      (B, C, H, W) float32 or bfloat16
    weight_kc11: (K, C, 1, 1) float32 -- 1x1 conv weight
    Returns (B, K, H, W) scores = scale_factor * cos(x_pixel, class_weight).
    """
    B, C, H, W = x_nchw.shape
    K = weight_kc11.shape[0]
    HW = H * W

    # Free reshape only (no transpose): NCHW -> (B, C, HW).
    x_flat = x_nchw.reshape(B, C, HW)
    in_itemsize = x_flat.dtype.itemsize

    # Normalize class weights once, fold in the scale factor (O(K*C) XLA work),
    # then match the activation dtype so the MXU runs in its native precision.
    w = weight_kc11.reshape(K, C).astype(jnp.float32)
    w_norm = jnp.sqrt(jnp.sum(w * w, axis=1, keepdims=True))          # (K, 1)
    w_n = ((jnp.float32(scale_factor) * w) / (w_norm + EPS)).astype(x_nchw.dtype)

    tile_hw = _choose_tile_hw(HW, C, B, in_itemsize)
    grid = (B, pl.cdiv(HW, tile_hw))   # partial last lane-tile handled by masking

    out_dtype = x_nchw.dtype
    out_itemsize = jnp.dtype(out_dtype).itemsize

    # Size the VMEM limit from the actual requirement (+ headroom): double-buffered
    # input and output tiles plus the resident weight block.
    needed = (2 * C * tile_hw * in_itemsize
              + 2 * K * tile_hw * out_itemsize
              + 2 * K * C * in_itemsize)
    vmem_limit = int(min(64 * 1024 * 1024,
                         max(32 * 1024 * 1024, needed + 8 * 1024 * 1024)))

    out_flat = pl.pallas_call(
        _cos_cls_kernel,
        out_shape=jax.ShapeDtypeStruct((B, K, HW), out_dtype),
        grid_spec=pltpu.PrefetchScalarGridSpec(
            num_scalar_prefetch=0,
            grid=grid,
            in_specs=[
                # (1, C, tile_hw) activation tile, batch dim squeezed out.
                pl.BlockSpec((None, C, tile_hw), lambda b, j: (b, 0, j)),
                # Full (K, C) weight, constant across the grid (fetched once).
                pl.BlockSpec((K, C), lambda b, j: (0, 0)),
            ],
            out_specs=pl.BlockSpec((None, K, tile_hw), lambda b, j: (b, 0, j)),
        ),
        compiler_params=pltpu.CompilerParams(
            dimension_semantics=("parallel", "parallel"),
            vmem_limit_bytes=vmem_limit,
        ),
    )(x_flat, w_n)

    # Free reshape back to NCHW output convention.
    return out_flat.reshape(B, K, H, W)


def _reference_forward(x_nchw, weight_kc11, scale_factor):
    """Pure-JAX reference mirroring the PyTorch forward (eval, weight_norm=False)."""
    x = x_nchw.astype(jnp.float32)
    x_norm = jnp.linalg.norm(x, axis=1, keepdims=True)
    x_n = x / (x_norm + EPS)
    w = weight_kc11.reshape(weight_kc11.shape[0], -1).astype(jnp.float32)
    w_norm = jnp.linalg.norm(w, axis=1, keepdims=True)
    w_n = w / (w_norm + EPS)
    cos = jnp.einsum("bchw,kc->bkhw", x_n, w_n,
                     precision=jax.lax.Precision.HIGHEST)
    return scale_factor * cos


# TODO(synk): the weight_norm=True branch (nn.utils.weight_norm reparameterization) and the
# in-place mutation of class_mat.weight.data are training-time side effects and are not
# modeled; only the eval forward output is.

if __name__ == "__main__":
    VAL_SCALE_FACTOR = 5.0   # cfg.CLASSIFIER.SEGHEAD.COSINE.val_scale_factor (eval mode)
    key = jax.random.PRNGKey(0)

    cases = [
        # (B, C, H, W, K, dtype, atol, rtol)
        (2, 32, 16, 16, 8,  jnp.float32,  5e-4, 5e-4),   # HW=256: lane-aligned tiles
        (1, 32, 14, 14, 21, jnp.float32,  5e-4, 5e-4),   # HW=196: masked partial lane-tile
        (1, 64, 16, 16, 8,  jnp.bfloat16, 6e-2, 5e-2),   # bf16 activation fast path
    ]
    for (B, C, H, W, K, dt, atol, rtol) in cases:
        key, kx, kw = jax.random.split(key, 3)
        x = jax.random.normal(kx, (B, C, H, W), dtype=jnp.float32).astype(dt)
        weight = jax.random.normal(kw, (K, C, 1, 1), dtype=jnp.float32) * 0.1

        out = pixel_classifier_forward(x, weight, scale_factor=VAL_SCALE_FACTOR)
        out = jax.block_until_ready(out)

        ref = _reference_forward(x, weight, VAL_SCALE_FACTOR)
        assert out.shape == (B, K, H, W)
        out_f32 = out.astype(jnp.float32)
        max_err = jnp.max(jnp.abs(out_f32 - ref))
        assert jnp.allclose(out_f32, ref, atol=atol, rtol=rtol), (
            f"mismatch (B={B},C={C},H={H},W={W},K={K},dtype={dt}): "
            f"max abs err {max_err}")

    print("KERNEL_OK")
</pallas_src>

<mosaic_0001>
module attributes {stable_mosaic.version = 11 : i64} {
  func.func @_cos_cls_kernel(%arg0: i32, %arg1: i32, %arg2: memref<1x32x128xf32, #tpu.memory_space<vmem>>, %arg3: memref<8x32xf32, #tpu.memory_space<vmem>>, %arg4: memref<1x8x128xf32, #tpu.memory_space<vmem>>) attributes {dimension_semantics = [#tpu.dimension_semantics<parallel>, #tpu.dimension_semantics<parallel>], iteration_bounds = array<i64: 2, 2>, scalar_prefetch = 0 : i64, scratch_operands = 0 : i64, tpu.core_type = #tpu.core_type<tc>, window_params = [{transform_indices = @transform_0, window_bounds = array<i64: 1, 32, 128>}, {pipeline_mode = #tpu.pipeline_mode<synchronous>, transform_indices = @transform_1, window_bounds = array<i64: 8, 32>}, {transform_indices = @transform_2, window_bounds = array<i64: 1, 8, 128>}]} {
    %c0 = arith.constant 0 : index
    %c0_0 = arith.constant 0 : index
    %c0_1 = arith.constant 0 : index
    %0 = vector.load %arg2[%c0, %c0_0, %c0_1] : memref<1x32x128xf32, #tpu.memory_space<vmem>>, vector<1x32x128xf32>
    %1 = vector.shape_cast %0 : vector<1x32x128xf32> to vector<32x128xf32>
    %2 = arith.mulf %1, %1 : vector<32x128xf32>
    %cst = arith.constant dense<0.000000e+00> : vector<128xf32>
    %3 = vector.multi_reduction <add>, %2, %cst [0] : vector<32x128xf32> to vector<128xf32>
    %4 = vector.shape_cast %3 : vector<128xf32> to vector<1x128xf32>
    %5 = math.sqrt %4 : vector<1x128xf32>
    %cst_2 = arith.constant 9.99999974E-6 : f32
    %6 = vector.broadcast %cst_2 : f32 to vector<1x128xf32>
    %7 = arith.addf %5, %6 : vector<1x128xf32>
    %8 = tpu.reciprocal %7 : vector<1x128xf32> -> vector<1x128xf32>
    %c0_3 = arith.constant 0 : index
    %c0_4 = arith.constant 0 : index
    %9 = vector.load %arg3[%c0_3, %c0_4] : memref<8x32xf32, #tpu.memory_space<vmem>>, vector<8x32xf32>
    %cst_5 = arith.constant dense<0.000000e+00> : vector<8x128xf32>
    %10 = tpu.matmul %9, %1, %cst_5 {dimension_numbers = #tpu.dot_dimension_numbers<[1], [0], [0], [1], [0, 0, 1, 1], [], []>} : vector<8x32xf32>, vector<32x128xf32>, vector<8x128xf32> -> vector<8x128xf32>
    %11 = vector.broadcast %8 : vector<1x128xf32> to vector<8x128xf32>
    %12 = arith.mulf %10, %11 : vector<8x128xf32>
    %c0_6 = arith.constant 0 : index
    %c0_7 = arith.constant 0 : index
    %c0_8 = arith.constant 0 : index
    %13 = vector.load %arg4[%c0_6, %c0_7, %c0_8] : memref<1x8x128xf32, #tpu.memory_space<vmem>>, vector<1x8x128xf32>
    %14 = vector.shape_cast %13 : vector<1x8x128xf32> to vector<8x128xf32>
    %15 = vector.shape_cast %12 : vector<8x128xf32> to vector<1x8x128xf32>
    tpu.vector_store %arg4[%c0_6, %c0_7, %c0_8], %15 {strides = array<i32>} : memref<1x8x128xf32, #tpu.memory_space<vmem>>, vector<1x8x128xf32>,
    return
  }
  func.func @transform_0(%arg0: i32, %arg1: i32) -> (i32, i32, i32) {
    %c0_i32 = arith.constant 0 : i32
    %c0_i32_0 = arith.constant 0 : i32
    return %arg0, %c0_i32, %arg1 : i32, i32, i32
  }
  func.func @transform_1(%arg0: i32, %arg1: i32) -> (i32, i32) {
    %c0_i32 = arith.constant 0 : i32
    %c0_i32_0 = arith.constant 0 : i32
    %c0_i32_1 = arith.constant 0 : i32
    return %c0_i32, %c0_i32_0 : i32, i32
  }
  func.func @transform_2(%arg0: i32, %arg1: i32) -> (i32, i32, i32) {
    %c0_i32 = arith.constant 0 : i32
    %c0_i32_0 = arith.constant 0 : i32
    return %arg0, %c0_i32, %arg1 : i32, i32, i32
  }
}

</mosaic_0001>

<llo_original>
// kernel: tpu_custom_call.1
$region0: #{tpu_custom_call.1}
  #allocation0 [shape = 'u32[]', space=smem, size = 0x4, offset = 0x4, fixed_abs, tag = 'smem constant byte address 0x4 - core index']
  #allocation1 [shape = 'u32[144,128]{1,0:T(1,128)}', space=vmem, size = 0x12000, scoped, tag = 'internal scratch']
  %s0 = inlined_call_operand.hbm [shape: f32[2,32,256], index: 0, kind: input, shape index: {}]
  %s1 = inlined_call_operand.hbm [shape: f32[8,32], index: 1, kind: input, shape index: {}]
  %s2 = inlined_call_operand.hbm [shape: f32[2,8,256], index: 2, kind: output, shape index: {}]
  %s3 = sld [smem:[#allocation0]]
  $region49: #{tpu_custom_call.1} parent=0
    _
  %s5 = ssub.s32 1, %s3
  %s6 = scalar_select 0, %s5, %s3
  $region1: #{tpu_custom_call.1} parent=0
    #allocation2 [shape = 'u8[32768]{0}', space=vmem, size = 0x8000, scoped, tag = 'input window, operand 0']
    #allocation3 [shape = 's32[2]{0}', space=sflag, size = 0x8, scoped, tag = 'scoped memory for tpu_custom_call.1']
    #allocation4 [shape = 's32[2]{0}', space=sflag, size = 0x8, scoped, tag = 'scoped memory for tpu_custom_call.1']
    #allocation5 [shape = 'u8[4096]{0}', space=vmem, size = 0x1000, scoped, tag = 'input window, operand 1, single buffered']
    #allocation6 [shape = 's32[1]{0}', space=sflag, size = 0x4, scoped, tag = 'scoped memory for tpu_custom_call.1']
    #allocation7 [shape = 'u8[8192]{0}', space=vmem, size = 0x2000, scoped, tag = 'output window, operand 0']
    %7 = vsyncpa [#allocation3], 0
    %s8 = scalar_lea.sflag [#allocation3], 1
    %9 = vsyncpa %s8, 0
    %10 = vsyncpa [#allocation6], 0
    %11 = vsyncpa [#allocation4], 0
    %s12 = scalar_lea.sflag [#allocation4], 1
    %13 = vsyncpa %s12, 0
    loop: start=0, step=1, limit=6
    $region2: #{tpu_custom_call.1} parent=1 // loop_pre_header
      _
    $region3: #{tpu_custom_call.1} parent=1 // loop_header
      %s15 = sphi 0, %s19
      %p16 = scmp.ge.s32.totalorder %s15, 6
      %s22 = sphi 0, %s34
      %s23 = sphi 0, %s30
      %s24 = sphi 0, %s22
      %s25 = sphi 0, %s23
      %s26 = sphi 0, %s24
      %s27 = sphi 0, %s25
      %s39 = sphi 0, %s41
      %s42 = sphi 0, %s39
      %s43 = sphi 0, %s42
      %s59 = sphi 0, %s43
      %s63 = sphi 0, %s63
      %s65 = sphi 0, %s63
      %s66 = sphi 0, %s65
      %s80 = sphi 0, %s66
      %s88 = sphi 0, %s90
      %s91 = sphi 0, %s88
      %s92 = sphi 0, %s91
      %s108 = sphi 0, %s92
    $region4: #{tpu_custom_call.1} parent=1 // loop_header_branch
      %18 = sbr.rel (%p16) target = $region8
    $region5: #{tpu_custom_call.1} parent=1 // loop_body
      %s20 = ssub.s32 %s15, 1
      %s21 = ssub.s32 %s15, 2
      %s28 = sadd.s32 1, %s23
      %p29 = scmp.ge.s32.totalorder %s28, 2
      %s30 = scalar_select %p29, 0, %s28
      %s31 = sadd.s32 1, %s22
      %s32 = scalar_select %p29, %s31, %s22
      %p33 = scmp.ge.s32.totalorder %s32, 2
      %s34 = scalar_select %p33, 0, %s32
      %s35 = ssub.s32 %s22, %s34
      %s36 = ssub.s32 %s23, %s30
      %s37 = sor.u32 %s35, %s36
      %p38 = scmp.eq.s32.totalorder %s37, 0
      %s40 = sadd.s32 %s39, 1
      %s41 = scalar_select %p38, %s39, %s40
      %p44 = pneg %p38
      %p45 = scmp.eq.s32.totalorder %s15, 3
      %p46 = por %p44, %p45
      %p47 = scmp.ne.s32.totalorder %s39, %s42
      %p48 = scmp.eq.s32.totalorder %s15, 0
      %p49 = por %p47, %p48
      %p50 = scmp.ne.s32.totalorder %s39, %s42
      %p51 = scmp.eq.s32.totalorder %s20, 3
      %p52 = por %p50, %p51
      %p53 = scmp.ne.s32.totalorder %s42, %s43
      %p54 = scmp.eq.s32.totalorder %s20, 0
      %p55 = por %p53, %p54
      %p56 = scmp.ne.s32.totalorder %s42, %s43
      %p57 = scmp.eq.s32.totalorder %s21, 3
      %p58 = por %p56, %p57
      %p60 = scmp.ne.s32.totalorder %s43, %s59
      %p61 = scmp.eq.s32.totalorder %s21, 0
      %p62 = por %p60, %p61
      %s64 = sadd.s32 %s63, 1
      %p67 = scmp.eq.s32.totalorder %s15, 3
      %p68 = scmp.ne.s32.totalorder %s63, %s65
      %p69 = scmp.eq.s32.totalorder %s15, 0
      %p70 = por %p68, %p69
      %p71 = scmp.ne.s32.totalorder %s63, %s65
      %p72 = scmp.eq.s32.totalorder %s20, 3
      %p73 = por %p71, %p72
      %p74 = scmp.ne.s32.totalorder %s65, %s66
      %p75 = scmp.eq.s32.totalorder %s20, 0
      %p76 = por %p74, %p75
      %p77 = scmp.ne.s32.totalorder %s65, %s66
      %p78 = scmp.eq.s32.totalorder %s21, 3
      %p79 = por %p77, %p78
      %p81 = scmp.ne.s32.totalorder %s66, %s80
      %p82 = scmp.eq.s32.totalorder %s21, 0
      %p83 = por %p81, %p82
      %s84 = ssub.s32 %s22, %s34
      %s85 = ssub.s32 %s23, %s30
      %s86 = sor.u32 %s84, %s85
      %p87 = scmp.eq.s32.totalorder %s86, 0
      %s89 = sadd.s32 %s88, 1
      %s90 = scalar_select %p87, %s88, %s89
      %p93 = pneg %p87
      %p94 = scmp.eq.s32.totalorder %s15, 3
      %p95 = por %p93, %p94
      %p96 = scmp.ne.s32.totalorder %s88, %s91
      %p97 = scmp.eq.s32.totalorder %s15, 0
      %p98 = por %p96, %p97
      %p99 = scmp.ne.s32.totalorder %s88, %s91
      %p100 = scmp.eq.s32.totalorder %s20, 3
      %p101 = por %p99, %p100
      %p102 = scmp.ne.s32.totalorder %s91, %s92
      %p103 = scmp.eq.s32.totalorder %s20, 0
      %p104 = por %p102, %p103
      %p105 = scmp.ne.s32.totalorder %s91, %s92
      %p106 = scmp.eq.s32.totalorder %s21, 3
      %p107 = por %p105, %p106
      %p109 = scmp.ne.s32.totalorder %s92, %s108
      %p110 = scmp.eq.s32.totalorder %s21, 0
      %p111 = por %p109, %p110
      %p112 = scmp.le.s32.totalorder 1, %s15
      %p113 = scmp.lt.s32.totalorder %s15, 5
      %p114 = pnand %p112, %p113
      %p115 = pneg %p114
      // Predicated region
      $region9: #{tpu_custom_call.1} parent=5 // pred_check
        _
      $region10: #{tpu_custom_call.1} parent=5 // pred_check_branch
        %117 = sbr.rel (%p114) target = $region12
      $region11: #{tpu_custom_call.1} parent=5 // pred_region
        %s118 = ssub.s32 %s15, 1
        // Predicated region
        $region13: #{tpu_custom_call.1} parent=11 // pred_check
          %p119 = pneg %p76
        $region14: #{tpu_custom_call.1} parent=11 // pred_check_branch
          %121 = sbr.rel (%p119) target = $region16
        $region15: #{tpu_custom_call.1} parent=11 // pred_region
          %s123 = ssub.s32 128, 128
          %124 = vsyncadd [#allocation6], %s123
          %s126 = sshll.u32 [#allocation5], 4
          %s127 = int_to_ptr.vmem [resolvable:$true] %s126
          %129 = dma.hbm_to_vmem [thread:$0]  %s1, 128, %s127, [#allocation6]
        $region16: #{tpu_custom_call.1} parent=11 // pred_fallthru
          _
      $region12: #{tpu_custom_call.1} parent=5 // pred_fallthru
        _
      %p130 = scmp.lt.s32.totalorder %s15, 4
      // Predicated region
      $region17: #{tpu_custom_call.1} parent=5 // pred_check
        %p131 = pneg %p130
      $region18: #{tpu_custom_call.1} parent=5 // pred_check_branch
        %133 = sbr.rel (%p131) target = $region20
      $region19: #{tpu_custom_call.1} parent=5 // pred_region
        // Predicated region
        $region21: #{tpu_custom_call.1} parent=19 // pred_check
          %p134 = pneg %p49
        $region22: #{tpu_custom_call.1} parent=19 // pred_check_branch
          %136 = sbr.rel (%p134) target = $region24
        $region23: #{tpu_custom_call.1} parent=19 // pred_region
          %s137 = sand.u32 %s39, 1
          %s138 = scalar_lea.sflag [#allocation3], %s137
          %s139 = sand.u32 %s39, 1
          %s140 = smul.addr %s139, 32
          %s141 = scalar_lea.vmem [#allocation2], %s140
          %s143 = ssub.s32 512, 512
          %144 = vsyncadd %s138, %s143
          %s145 = smul.addr %s22, 8
          %s146 = sadd.s32 %s23, %s145
          %s147 = smul.addr %s146, 128
          %s148 = scalar_lea.hbm %s0, %s147
          %s149 = sshll.u32 %s141, 4
          %s150 = int_to_ptr.vmem [resolvable:$true] %s149
          %155 = dma.hbm_to_vmem [thread:$0]  %s148, 512, %s150, %s138, 256, 128, 8
        $region24: #{tpu_custom_call.1} parent=19 // pred_fallthru
          _
      $region20: #{tpu_custom_call.1} parent=5 // pred_fallthru
        _
      %p156 = scmp.le.s32.totalorder 1, %s15
      %p157 = scmp.lt.s32.totalorder %s15, 5
      %p158 = pnand %p156, %p157
      %p159 = pneg %p158
      // Predicated region
      $region25: #{tpu_custom_call.1} parent=5 // pred_check
        _
      $region26: #{tpu_custom_call.1} parent=5 // pred_check_branch
        %161 = sbr.rel (%p158) target = $region28
      $region27: #{tpu_custom_call.1} parent=5 // pred_region
        %s162 = ssub.s32 %s15, 1
        %s163 = sand.u32 %s42, 1
        %s164 = scalar_lea.sflag [#allocation3], %s163
        %s165 = sand.u32 %s42, 1
        %s166 = smul.addr %s165, 32
        %s167 = scalar_lea.vmem [#allocation2], %s166
        // Predicated region
        $region29: #{tpu_custom_call.1} parent=27 // pred_check
          %p168 = pneg %p55
        $region30: #{tpu_custom_call.1} parent=27 // pred_check_branch
          %170 = sbr.rel (%p168) target = $region32
        $region31: #{tpu_custom_call.1} parent=27 // pred_region
          %171 = dma.done %s164, 512
        $region32: #{tpu_custom_call.1} parent=27 // pred_fallthru
          _
        // Predicated region
        $region33: #{tpu_custom_call.1} parent=27 // pred_check
          %p172 = pneg %p76
        $region34: #{tpu_custom_call.1} parent=27 // pred_check_branch
          %174 = sbr.rel (%p172) target = $region36
        $region35: #{tpu_custom_call.1} parent=27 // pred_region
          %175 = dma.done [#allocation6], 128
        $region36: #{tpu_custom_call.1} parent=27 // pred_fallthru
          _
        %s176 = sand.u32 %s42, 1
        %s177 = scalar_lea.sflag [#allocation3], %s176
        %s178 = sand.u32 %s42, 1
        %s179 = smul.addr %s178, 32
        %s180 = scalar_lea.vmem [#allocation2], %s179
        %p181 = pneg %p55
        %p182 = pneg %p52
        %p183 = pneg %p76
        %p184 = pneg %p73
        %p185 = pneg %p104
        %p186 = pneg %p101
        %s187 = sand.u32 %s91, 1
        %s188 = scalar_lea.sflag [#allocation4], %s187
        %s189 = sand.u32 %s91, 1
        %s190 = smul.addr %s189, 8
        %s191 = scalar_lea.vmem [#allocation7], %s190
        %v192 = vld [vmem:[%s167] sm:$0xff]
        %v193 = vld [vmem:[%s167 + $0x8] sm:$0xff]
        %v194 = vld [vmem:[%s167 + $0x10] sm:$0xff]
        %v195 = vld [vmem:[%s167 + $0x18] sm:$0xff]
        %v196 = vmul.f32 %v192, %v192
        %v197 = vmul.f32 %v193, %v193
        %v198 = vmul.f32 %v194, %v194
        %v199 = vmul.f32 %v195, %v195
        %v200 = vadd.f32 %v196, %v197
        %v201 = vadd.f32 %v200, %v198
        %v202 = vadd.f32 %v201, %v199
        %v203 = vrot.slane %v202, 4
        %v204 = vadd.f32 %v202, %v203
        %v205 = vrot.slane %v204, 2
        %v206 = vadd.f32 %v204, %v205
        %v207 = vrot.slane %v206, 1
        %v208 = vadd.f32 %v206, %v207
        %v209 = vrsqrt.pop %v208
        %v210 = vmul.f32 %v208, %v209
        %vm211 = vcmp.eq.f32.partialorder %v208, inf
        %v212 = vsel %vm211, %v208, %v210
        %vm213 = vcmp.eq.f32.partialorder %v208, 0.0
        %v214 = vand.u32 %v208, 2147483648
        %v215 = vsel %vm213, %v214, %v212
        %v216 = vadd.f32 %v215, 1e-05
        %v217 = vrcp.pop %v216
        %v218 = vld [vmem:[#allocation5] sm:$0xff]
        %vm219 = vcmask 261120
        %v221 = vsel %vm219, %v218, 0
        %223 = vmatprep.subr.mxu0 0.0
        %224 = vmatpush1.msra.mxu0 %v192
        %225 = vmatprep.subr.mxu0 0.0
        %226 = vmatpush1.msra.mxu0 %v193
        %227 = vmatprep.subr.mxu0 0.0
        %228 = vmatpush1.msra.mxu0 %v194
        %229 = vmatprep.subr.mxu0 0.0
        %230 = vmatpush1.msra.mxu0 %v195
        %231 = vmatprep.subr.mxu0 0.0
        %232 = vmatpush1.msra.mxu0 0.0
        %233 = vmatprep.subr.mxu0 0.0
        %234 = vmatpush1.msra.mxu0 0.0
        %235 = vmatprep.subr.mxu0 0.0
        %236 = vmatpush1.msra.mxu0 0.0
        %237 = vmatprep.subr.mxu0 0.0
        %238 = vmatpush1.msra.mxu0 0.0
        %239 = vmatprep.subr.mxu0 0.0
        %240 = vmatpush1.msra.mxu0 0.0
        %241 = vmatprep.subr.mxu0 0.0
        %242 = vmatpush1.msra.mxu0 0.0
        %243 = vmatprep.subr.mxu0 0.0
        %244 = vmatpush1.msra.mxu0 0.0
        %245 = vmatprep.subr.mxu0 0.0
        %246 = vmatpush1.msra.mxu0 0.0
        %247 = vmatprep.subr.mxu0 0.0
        %248 = vmatpush1.msra.mxu0 0.0
        %249 = vmatprep.subr.mxu0 0.0
        %250 = vmatpush1.msra.mxu0 0.0
        %251 = vmatprep.subr.mxu0 0.0
        %252 = vmatpush1.msra.mxu0 0.0
        %253 = vmatprep.subr.mxu0 0.0
        %254 = vmatpush1.msra.mxu0 0.0
        %255 = vmatprep.subr.mxu0 0.0
        %256 = vmatpush1.msra.mxu0 0.0
        %257 = vmatprep.subr.mxu0 0.0
        %258 = vmatpush1.msra.mxu0 0.0
        %259 = vmatprep.subr.mxu0 0.0
        %260 = vmatpush1.msra.mxu0 0.0
        %261 = vmatprep.subr.mxu0 0.0
        %262 = vmatpush1.msra.mxu0 0.0
        %263 = vmatprep.subr.mxu0 0.0
        %264 = vmatpush1.msra.mxu0 0.0
        %265 = vmatprep.subr.mxu0 0.0
        %266 = vmatpush1.msra.mxu0 0.0
        %267 = vmatprep.subr.mxu0 0.0
        %268 = vmatpush1.msra.mxu0 0.0
        %269 = vmatprep.subr.mxu0 0.0
        %270 = vmatpush1.msra.mxu0 0.0
        %271 = vmatprep.subr.mxu0 0.0
        %272 = vmatpush1.msra.mxu0 0.0
        %273 = vmatprep.subr.mxu0 0.0
        %274 = vmatpush1.msra.mxu0 0.0
        %275 = vmatprep.subr.mxu0 0.0
        %276 = vmatpush1.msra.mxu0 0.0
        %277 = vmatprep.subr.mxu0 0.0
        %278 = vmatpush1.msra.mxu0 0.0
        %279 = vmatprep.subr.mxu0 0.0
        %280 = vmatpush1.msra.mxu0 0.0
        %281 = vmatprep.subr.mxu0 0.0
        %282 = vmatpush1.msra.mxu0 0.0
        %283 = vmatprep.subr.mxu0 0.0
        %284 = vmatpush1.msra.mxu0 0.0
        %285 = vmatprep.subr.mxu0 0.0
        %286 = vmatpush1.msra.mxu0 0.0
        %287 = vmatprep.mubr.f32.mxu0 0.0
        %288 = vmatmul.mubr.f32.gmra.mrb[0].mxu0 %v221
        %v289 = vpop.f32.mrb[0].mxu0
        %v290 = vadd.f32 0.0, %v289
        %v291 = vpop.f32.mrb[0].mxu0
        %292 = vdwg.mxu0
        %v293 = vmul.f32 %v290, %v217
        %294 = vst [vmem:[%s191] sm:$0xff] %v293
        %s295 = sand.u32 %s91, 1
        %s296 = scalar_lea.sflag [#allocation4], %s295
        %s297 = sand.u32 %s91, 1
        %s298 = smul.addr %s297, 8
        %s299 = scalar_lea.vmem [#allocation7], %s298
        // Predicated region
        $region37: #{tpu_custom_call.1} parent=27 // pred_check
          %p300 = pneg %p101
        $region38: #{tpu_custom_call.1} parent=27 // pred_check_branch
          %302 = sbr.rel (%p300) target = $region40
        $region39: #{tpu_custom_call.1} parent=27 // pred_region
          %s304 = ssub.s32 128, 128
          %305 = vsyncadd %s296, %s304
          %s306 = smul.addr %s24, 2
          %s307 = sadd.s32 %s25, %s306
          %s308 = smul.addr %s307, 128
          %s309 = scalar_lea.hbm %s2, %s308
          %s311 = sshll.u32 %s299, 4
          %s312 = int_to_ptr.vmem [resolvable:$true] %s311
          %314 = dma.vmem_to_hbm [thread:$0]  %s312, 128, %s309, %s296
        $region40: #{tpu_custom_call.1} parent=27 // pred_fallthru
          _
      $region28: #{tpu_custom_call.1} parent=5 // pred_fallthru
        _
      %p315 = scmp.le.s32.totalorder 2, %s15
      // Predicated region
      $region41: #{tpu_custom_call.1} parent=5 // pred_check
        %p316 = pneg %p315
      $region42: #{tpu_custom_call.1} parent=5 // pred_check_branch
        %318 = sbr.rel (%p316) target = $region44
      $region43: #{tpu_custom_call.1} parent=5 // pred_region
        %s319 = ssub.s32 %s15, 2
        // Predicated region
        $region45: #{tpu_custom_call.1} parent=43 // pred_check
          %p320 = pneg %p107
        $region46: #{tpu_custom_call.1} parent=43 // pred_check_branch
          %322 = sbr.rel (%p320) target = $region48
        $region47: #{tpu_custom_call.1} parent=43 // pred_region
          %s323 = sand.u32 %s92, 1
          %s324 = scalar_lea.sflag [#allocation4], %s323
          %s325 = sand.u32 %s92, 1
          %s326 = smul.addr %s325, 8
          %s327 = scalar_lea.vmem [#allocation7], %s326
          %328 = dma.done %s324, 128
        $region48: #{tpu_custom_call.1} parent=43 // pred_fallthru
          _
      $region44: #{tpu_custom_call.1} parent=5 // pred_fallthru
        _
    $region6: #{tpu_custom_call.1} parent=1 // loop_footer
      %s19 = sadd.s32 1, %s15
    $region7: #{tpu_custom_call.1} parent=1 // loop_footer_branch
      %14 = sbr.rel target = $region3
    $region8: #{tpu_custom_call.1} parent=1 // loop_exit
      _
    %329 = vsyncpa [#allocation3], 1
    %s330 = scalar_lea.sflag [#allocation3], 1
    %331 = vsyncpa %s330, 1
    %332 = vsyncpa [#allocation6], 1
    %333 = vsyncpa [#allocation4], 1
    %s334 = scalar_lea.sflag [#allocation4], 1
    %335 = vsyncpa %s334, 1

</llo_original>
